<compile_context>
chip_gen: v5e
topology: v5e:2x2
jax: 0.10.0
libtpu: 0.0.40
codegen_flags: <defaults>
</compile_context>

<pallas_src>
import functools

import numpy as np
import jax
import jax.numpy as jnp
from jax.experimental import pallas as pl
from jax.experimental.pallas import tpu as pltpu


# ---------------------------------------------------------------------------
# Shared cascade (phase-decomposed stencil).  `emit_final(v, val)` is called for
# every phase of the LAST stage as soon as it is produced (write-through).
# ---------------------------------------------------------------------------
def _run_cascade(x, scales, shift_right, shift_left, emit_final):
    phases = [x]
    n_stages = len(scales)
    for si, s in enumerate(scales):
        last = si == n_stages - 1
        P = len(phases)
        inv = 1.0 / (2 * s + 1)
        new_phases = None if last else [None] * (P * s)
        for u in range(P):
            xc = phases[u]
            # neighbours along the flattened (q*P + u) index:
            xp = phases[u - 1] if u > 0 else shift_right(phases[P - 1])
            xn = phases[u + 1] if u < P - 1 else shift_left(phases[0])
            # 3-tap coefficients are arithmetic progressions in t -> recurrence
            delta = (xn - xp) * inv
            val = (s * (xp + xc) + xn) * inv            # t = 0
            for t in range(s):
                if t:
                    val = val + delta
                if last:
                    emit_final(u * s + t, val)
                else:
                    new_phases[u * s + t] = val
        if not last:
            phases = new_phases


def _make_shifts(Rb, T):
    # Hoisted: iota + boundary masks computed once, reused by every stage.
    col = jax.lax.broadcasted_iota(jnp.int32, (Rb, T), dimension=1)
    mask_first = col == 0
    mask_last = col == T - 1

    def shift_right(a):      # out[:, q] = a[:, q-1], zero at q == 0
        return jnp.where(mask_first, 0.0, pltpu.roll(a, 1, 1))

    def shift_left(a):       # out[:, q] = a[:, q+1], zero at q == T-1
        return jnp.where(mask_last, 0.0, pltpu.roll(a, T - 1, 1))

    return shift_right, shift_left


# ---------------------------------------------------------------------------
# Primary kernel: emits the final output already interleaved (Rb, T*S).
# ---------------------------------------------------------------------------
def _interleave_kernel(x_ref, o_ref, *, scales):
    Rb, T = x_ref.shape
    S = int(np.prod(scales))
    x = x_ref[...].astype(jnp.float32)
    shift_right, shift_left = _make_shifts(Rb, T)

    out_phases = [None] * S

    def emit(v, val):
        out_phases[v] = val

    _run_cascade(x, scales, shift_right, shift_left, emit)

    # Interleave: out[r, q*S + v] = out_phases[v][r, q].  Done in-kernel so the
    # writeback is a single lane-dense (rb, T*S) store and no XLA transpose is needed.
    inter = jnp.concatenate([p[:, :, None] for p in out_phases], axis=-1)   # (Rb, T, S)
    o_ref[...] = inter.reshape(Rb, T * S).astype(o_ref.dtype)


# ---------------------------------------------------------------------------
# Fallback kernel: phase-major output (S, Rb, T), interleaved afterwards by XLA.
# Last-stage phases are stored as soon as computed (write-through).
# ---------------------------------------------------------------------------
def _phase_major_kernel(x_ref, o_ref, *, scales):
    Rb, T = x_ref.shape
    x = x_ref[...].astype(jnp.float32)
    shift_right, shift_left = _make_shifts(Rb, T)

    def emit(v, val):
        o_ref[v, :, :] = val.astype(o_ref.dtype)        # (Rb, T) lane-dense store

    _run_cascade(x, scales, shift_right, shift_left, emit)


# ---------------------------------------------------------------------------
# Sizing helpers.
# ---------------------------------------------------------------------------
def _vmem_budget_and_limit():
    """Per-generation (budget for block choice, vmem_limit_bytes)."""
    try:
        cap = int(pltpu.get_tpu_info().vmem_capacity_bytes)
    except Exception:
        cap = 64 * 1024 * 1024                       # conservative: assume v7x
    if cap >= 100 * 1024 * 1024:                     # v5e / v6e: 128 MiB VMEM
        return 16 * 1024 * 1024, 96 * 1024 * 1024
    return 8 * 1024 * 1024, 48 * 1024 * 1024         # v7x: 64 MiB VMEM


def _choose_row_block(R, T, S, budget_bytes):
    """Row block sized against VMEM budget, with >= ~4 grid steps when R allows."""
    # Per row of f32: input x2 (double buffer) + interleaved out x2 + ~S live phases
    # + ~2S relayout / spill headroom  ->  (5S + 4) * T words.
    bytes_per_row = (5 * S + 4) * T * 4
    rb = budget_bytes // max(bytes_per_row, 1)
    rb = max(8, min(int(rb) // 8 * 8, 256))
    r8 = ((R + 7) // 8) * 8
    # Keep at least ~4 grid steps (dual-TC v7x + DMA/compute overlap).
    rb = min(rb, max(8, (((r8 + 3) // 4) + 7) // 8 * 8))
    rb = min(rb, r8)
    while r8 % rb:            # make rb divide padded rows (terminates at 8)
        rb -= 8
    return rb


# ---------------------------------------------------------------------------
# Wrapper.
# ---------------------------------------------------------------------------
def _upsample_interleaved(x, scales, S, rb, Rp, T, out_dtype, vmem_limit):
    return pl.pallas_call(
        functools.partial(_interleave_kernel, scales=scales),
        out_shape=jax.ShapeDtypeStruct((Rp, T * S), out_dtype),
        grid_spec=pltpu.PrefetchScalarGridSpec(
            num_scalar_prefetch=0,
            grid=(Rp // rb,),
            in_specs=[pl.BlockSpec((rb, T), lambda i: (i, 0))],
            out_specs=pl.BlockSpec((rb, T * S), lambda i: (i, 0)),
        ),
        compiler_params=pltpu.CompilerParams(
            dimension_semantics=("parallel",),
            vmem_limit_bytes=vmem_limit),
    )(x)


def _upsample_phase_major(x, scales, S, rb, Rp, T, out_dtype, vmem_limit):
    phases = pl.pallas_call(
        functools.partial(_phase_major_kernel, scales=scales),
        out_shape=jax.ShapeDtypeStruct((S, Rp, T), out_dtype),
        grid_spec=pltpu.PrefetchScalarGridSpec(
            num_scalar_prefetch=0,
            grid=(Rp // rb,),
            in_specs=[pl.BlockSpec((rb, T), lambda i: (i, 0))],
            out_specs=pl.BlockSpec((S, rb, T), lambda i: (0, i, 0)),
        ),
        compiler_params=pltpu.CompilerParams(
            dimension_semantics=("parallel",),
            vmem_limit_bytes=vmem_limit),
    )(x)
    # Single interleave in XLA: phases[v, r, q] -> out[r, q*S + v]
    return phases.transpose(1, 2, 0).reshape(Rp, T * S)


def upsample_network(feature, upsample_scales):
    """Pallas equivalent of UpsampleNetwork.forward.  feature: (B, C, T)."""
    B, C, T = feature.shape
    scales = tuple(int(s) for s in upsample_scales)
    if not scales:
        return feature
    S = int(np.prod(scales))
    R = B * C

    budget, vmem_limit = _vmem_budget_and_limit()
    rb = _choose_row_block(R, T, S, budget)
    Rp = ((R + rb - 1) // rb) * rb

    x = feature.reshape(R, T)
    if Rp != R:
        x = jnp.pad(x, ((0, Rp - R), (0, 0)))

    try:
        out = _upsample_interleaved(x, scales, S, rb, Rp, T, feature.dtype, vmem_limit)
        out = jax.block_until_ready(out)
    except Exception:
        # Lane-interleave relayout did not lower on this Mosaic version / chip:
        # fall back to the phase-major layout + one XLA transpose (known good).
        out = _upsample_phase_major(x, scales, S, rb, Rp, T, feature.dtype, vmem_limit)

    if Rp != R:
        out = out[:R]
    return out.reshape(B, C, T * S)


# ---------------------------------------------------------------------------
# Pure-JAX reference matching the PyTorch forward pass literally.
# ---------------------------------------------------------------------------
def upsample_network_ref(feature, upsample_scales):
    f = feature[:, None]                              # (B, 1, C, T)
    for s in upsample_scales:
        f = jnp.repeat(f, s, axis=-1)                 # nearest interpolate
        T = f.shape[-1]
        fp = jnp.pad(f, ((0, 0), (0, 0), (0, 0), (s, s)))
        acc = jnp.zeros_like(f)
        for i in range(2 * s + 1):                    # box conv, weight 1/(2s+1)
            acc = acc + fp[..., i:i + T]
        f = acc / (2 * s + 1)
    return f[:, 0]                                    # squeeze channel dim


if __name__ == "__main__":
    upsample_scales = (2, 3)
    B, C, T = 2, 4, 16
    key = jax.random.PRNGKey(0)
    feature = jax.random.normal(key, (B, C, T), dtype=jnp.float32)

    out = upsample_network(feature, upsample_scales)
    out = jax.block_until_ready(out)

    ref = upsample_network_ref(feature, upsample_scales)
    assert out.shape == (B, C, T * int(np.prod(upsample_scales))), out.shape
    np.testing.assert_allclose(np.asarray(out), np.asarray(ref),
                               rtol=1e-5, atol=1e-5)
    print("KERNEL_OK")
</pallas_src>

<mosaic_0001>
module attributes {stable_mosaic.version = 11 : i64} {
  func.func @_interleave_kernel(%arg0: i32, %arg1: memref<8x16xf32, #tpu.memory_space<vmem>>, %arg2: memref<8x96xf32, #tpu.memory_space<vmem>>) attributes {dimension_semantics = [#tpu.dimension_semantics<parallel>], iteration_bounds = array<i64: 1>, scalar_prefetch = 0 : i64, scratch_operands = 0 : i64, tpu.core_type = #tpu.core_type<tc>, window_params = [{transform_indices = @transform_0, window_bounds = array<i64: 8, 16>}, {transform_indices = @transform_1, window_bounds = array<i64: 8, 96>}]} {
    %c0 = arith.constant 0 : index
    %c0_0 = arith.constant 0 : index
    %0 = vector.load %arg1[%c0, %c0_0] : memref<8x16xf32, #tpu.memory_space<vmem>>, vector<8x16xf32>
    %1 = tpu.iota {dimensions = array<i32: 1>} : vector<8x16xi32>
    %c0_i32 = arith.constant 0 : i32
    %2 = vector.broadcast %c0_i32 : i32 to vector<8x16xi32>
    %3 = arith.cmpi eq, %1, %2 : vector<8x16xi32>
    %c15_i32 = arith.constant 15 : i32
    %4 = vector.broadcast %c15_i32 : i32 to vector<8x16xi32>
    %5 = arith.cmpi eq, %1, %4 : vector<8x16xi32>
    %c1_i32 = arith.constant 1 : i32
    %6 = tpu.dynamic_rotate %0 by %c1_i32 dim 1 : vector<8x16xf32>, i32 -> vector<8x16xf32>
    %cst = arith.constant 0.000000e+00 : f32
    %7 = vector.broadcast %cst : f32 to vector<8x16xf32>
    %8 = arith.select %3, %7, %6 : vector<8x16xi1>, vector<8x16xf32>
    %c15_i32_1 = arith.constant 15 : i32
    %9 = tpu.dynamic_rotate %0 by %c15_i32_1 dim 1 : vector<8x16xf32>, i32 -> vector<8x16xf32>
    %cst_2 = arith.constant 0.000000e+00 : f32
    %10 = vector.broadcast %cst_2 : f32 to vector<8x16xf32>
    %11 = arith.select %5, %10, %9 : vector<8x16xi1>, vector<8x16xf32>
    %12 = arith.subf %11, %8 : vector<8x16xf32>
    %cst_3 = arith.constant 2.000000e-01 : f32
    %13 = vector.broadcast %cst_3 : f32 to vector<8x16xf32>
    %14 = arith.mulf %12, %13 : vector<8x16xf32>
    %15 = arith.addf %8, %0 : vector<8x16xf32>
    %cst_4 = arith.constant 2.000000e+00 : f32
    %16 = vector.broadcast %cst_4 : f32 to vector<8x16xf32>
    %17 = arith.mulf %16, %15 : vector<8x16xf32>
    %18 = arith.addf %17, %11 : vector<8x16xf32>
    %cst_5 = arith.constant 2.000000e-01 : f32
    %19 = vector.broadcast %cst_5 : f32 to vector<8x16xf32>
    %20 = arith.mulf %18, %19 : vector<8x16xf32>
    %21 = arith.addf %20, %14 : vector<8x16xf32>
    %c1_i32_6 = arith.constant 1 : i32
    %22 = tpu.dynamic_rotate %21 by %c1_i32_6 dim 1 : vector<8x16xf32>, i32 -> vector<8x16xf32>
    %cst_7 = arith.constant 0.000000e+00 : f32
    %23 = vector.broadcast %cst_7 : f32 to vector<8x16xf32>
    %24 = arith.select %3, %23, %22 : vector<8x16xi1>, vector<8x16xf32>
    %25 = arith.subf %21, %24 : vector<8x16xf32>
    %cst_8 = arith.constant 0.142857149 : f32
    %26 = vector.broadcast %cst_8 : f32 to vector<8x16xf32>
    %27 = arith.mulf %25, %26 : vector<8x16xf32>
    %28 = arith.addf %24, %20 : vector<8x16xf32>
    %cst_9 = arith.constant 3.000000e+00 : f32
    %29 = vector.broadcast %cst_9 : f32 to vector<8x16xf32>
    %30 = arith.mulf %29, %28 : vector<8x16xf32>
    %31 = arith.addf %30, %21 : vector<8x16xf32>
    %cst_10 = arith.constant 0.142857149 : f32
    %32 = vector.broadcast %cst_10 : f32 to vector<8x16xf32>
    %33 = arith.mulf %31, %32 : vector<8x16xf32>
    %34 = arith.addf %33, %27 : vector<8x16xf32>
    %35 = arith.addf %34, %27 : vector<8x16xf32>
    %c15_i32_11 = arith.constant 15 : i32
    %36 = tpu.dynamic_rotate %20 by %c15_i32_11 dim 1 : vector<8x16xf32>, i32 -> vector<8x16xf32>
    %cst_12 = arith.constant 0.000000e+00 : f32
    %37 = vector.broadcast %cst_12 : f32 to vector<8x16xf32>
    %38 = arith.select %5, %37, %36 : vector<8x16xi1>, vector<8x16xf32>
    %39 = arith.subf %38, %20 : vector<8x16xf32>
    %cst_13 = arith.constant 0.142857149 : f32
    %40 = vector.broadcast %cst_13 : f32 to vector<8x16xf32>
    %41 = arith.mulf %39, %40 : vector<8x16xf32>
    %42 = arith.addf %20, %21 : vector<8x16xf32>
    %cst_14 = arith.constant 3.000000e+00 : f32
    %43 = vector.broadcast %cst_14 : f32 to vector<8x16xf32>
    %44 = arith.mulf %43, %42 : vector<8x16xf32>
    %45 = arith.addf %44, %38 : vector<8x16xf32>
    %cst_15 = arith.constant 0.142857149 : f32
    %46 = vector.broadcast %cst_15 : f32 to vector<8x16xf32>
    %47 = arith.mulf %45, %46 : vector<8x16xf32>
    %48 = arith.addf %47, %41 : vector<8x16xf32>
    %49 = arith.addf %48, %41 : vector<8x16xf32>
    %50 = vector.shape_cast %33 : vector<8x16xf32> to vector<8x16x1xf32>
    %51 = vector.shape_cast %34 : vector<8x16xf32> to vector<8x16x1xf32>
    %52 = vector.shape_cast %35 : vector<8x16xf32> to vector<8x16x1xf32>
    %53 = vector.shape_cast %47 : vector<8x16xf32> to vector<8x16x1xf32>
    %54 = vector.shape_cast %48 : vector<8x16xf32> to vector<8x16x1xf32>
    %55 = vector.shape_cast %49 : vector<8x16xf32> to vector<8x16x1xf32>
    %56 = tpu.concatenate %50, %51, %52, %53, %54, %55 in 2 : vector<8x16x1xf32>, vector<8x16x1xf32>, vector<8x16x1xf32>, vector<8x16x1xf32>, vector<8x16x1xf32>, vector<8x16x1xf32> -> vector<8x16x6xf32>
    %57 = vector.shape_cast %56 : vector<8x16x6xf32> to vector<8x96xf32>
    %c0_16 = arith.constant 0 : index
    %c0_17 = arith.constant 0 : index
    %58 = vector.load %arg2[%c0_16, %c0_17] : memref<8x96xf32, #tpu.memory_space<vmem>>, vector<8x96xf32>
    tpu.vector_store %arg2[%c0_16, %c0_17], %57 {strides = array<i32>} : memref<8x96xf32, #tpu.memory_space<vmem>>, vector<8x96xf32>,
    return
  }
  func.func @transform_0(%arg0: i32) -> (i32, i32) {
    %c0_i32 = arith.constant 0 : i32
    %c0_i32_0 = arith.constant 0 : i32
    return %arg0, %c0_i32 : i32, i32
  }
  func.func @transform_1(%arg0: i32) -> (i32, i32) {
    %c0_i32 = arith.constant 0 : i32
    %c0_i32_0 = arith.constant 0 : i32
    return %arg0, %c0_i32 : i32, i32
  }
}

module attributes {stable_mosaic.version = 11 : i64} {
  func.func @_phase_major_kernel(%arg0: i32, %arg1: memref<8x16xf32, #tpu.memory_space<vmem>>, %arg2: memref<6x8x16xf32, #tpu.memory_space<vmem>>) attributes {dimension_semantics = [#tpu.dimension_semantics<parallel>], iteration_bounds = array<i64: 1>, scalar_prefetch = 0 : i64, scratch_operands = 0 : i64, tpu.core_type = #tpu.core_type<tc>, window_params = [{transform_indices = @transform_0, window_bounds = array<i64: 8, 16>}, {transform_indices = @transform_1, window_bounds = array<i64: 6, 8, 16>}]} {
    %c0 = arith.constant 0 : index
    %c0_0 = arith.constant 0 : index
    %0 = vector.load %arg1[%c0, %c0_0] : memref<8x16xf32, #tpu.memory_space<vmem>>, vector<8x16xf32>
    %1 = tpu.iota {dimensions = array<i32: 1>} : vector<8x16xi32>
    %c0_i32 = arith.constant 0 : i32
    %2 = vector.broadcast %c0_i32 : i32 to vector<8x16xi32>
    %3 = arith.cmpi eq, %1, %2 : vector<8x16xi32>
    %c15_i32 = arith.constant 15 : i32
    %4 = vector.broadcast %c15_i32 : i32 to vector<8x16xi32>
    %5 = arith.cmpi eq, %1, %4 : vector<8x16xi32>
    %c1_i32 = arith.constant 1 : i32
    %6 = tpu.dynamic_rotate %0 by %c1_i32 dim 1 : vector<8x16xf32>, i32 -> vector<8x16xf32>
    %cst = arith.constant 0.000000e+00 : f32
    %7 = vector.broadcast %cst : f32 to vector<8x16xf32>
    %8 = arith.select %3, %7, %6 : vector<8x16xi1>, vector<8x16xf32>
    %c15_i32_1 = arith.constant 15 : i32
    %9 = tpu.dynamic_rotate %0 by %c15_i32_1 dim 1 : vector<8x16xf32>, i32 -> vector<8x16xf32>
    %cst_2 = arith.constant 0.000000e+00 : f32
    %10 = vector.broadcast %cst_2 : f32 to vector<8x16xf32>
    %11 = arith.select %5, %10, %9 : vector<8x16xi1>, vector<8x16xf32>
    %12 = arith.subf %11, %8 : vector<8x16xf32>
    %cst_3 = arith.constant 2.000000e-01 : f32
    %13 = vector.broadcast %cst_3 : f32 to vector<8x16xf32>
    %14 = arith.mulf %12, %13 : vector<8x16xf32>
    %15 = arith.addf %8, %0 : vector<8x16xf32>
    %cst_4 = arith.constant 2.000000e+00 : f32
    %16 = vector.broadcast %cst_4 : f32 to vector<8x16xf32>
    %17 = arith.mulf %16, %15 : vector<8x16xf32>
    %18 = arith.addf %17, %11 : vector<8x16xf32>
    %cst_5 = arith.constant 2.000000e-01 : f32
    %19 = vector.broadcast %cst_5 : f32 to vector<8x16xf32>
    %20 = arith.mulf %18, %19 : vector<8x16xf32>
    %21 = arith.addf %20, %14 : vector<8x16xf32>
    %c1_i32_6 = arith.constant 1 : i32
    %22 = tpu.dynamic_rotate %21 by %c1_i32_6 dim 1 : vector<8x16xf32>, i32 -> vector<8x16xf32>
    %cst_7 = arith.constant 0.000000e+00 : f32
    %23 = vector.broadcast %cst_7 : f32 to vector<8x16xf32>
    %24 = arith.select %3, %23, %22 : vector<8x16xi1>, vector<8x16xf32>
    %25 = arith.subf %21, %24 : vector<8x16xf32>
    %cst_8 = arith.constant 0.142857149 : f32
    %26 = vector.broadcast %cst_8 : f32 to vector<8x16xf32>
    %27 = arith.mulf %25, %26 : vector<8x16xf32>
    %28 = arith.addf %24, %20 : vector<8x16xf32>
    %cst_9 = arith.constant 3.000000e+00 : f32
    %29 = vector.broadcast %cst_9 : f32 to vector<8x16xf32>
    %30 = arith.mulf %29, %28 : vector<8x16xf32>
    %31 = arith.addf %30, %21 : vector<8x16xf32>
    %cst_10 = arith.constant 0.142857149 : f32
    %32 = vector.broadcast %cst_10 : f32 to vector<8x16xf32>
    %33 = arith.mulf %31, %32 : vector<8x16xf32>
    %c0_11 = arith.constant 0 : index
    %c0_12 = arith.constant 0 : index
    %c0_13 = arith.constant 0 : index
    %34 = vector.load %arg2[%c0_11, %c0_12, %c0_13] : memref<6x8x16xf32, #tpu.memory_space<vmem>>, vector<1x8x16xf32>
    %35 = vector.shape_cast %34 : vector<1x8x16xf32> to vector<8x16xf32>
    %36 = vector.shape_cast %33 : vector<8x16xf32> to vector<1x8x16xf32>
    tpu.vector_store %arg2[%c0_11, %c0_12, %c0_13], %36 {strides = array<i32>} : memref<6x8x16xf32, #tpu.memory_space<vmem>>, vector<1x8x16xf32>,
    %37 = arith.addf %33, %27 : vector<8x16xf32>
    %c1 = arith.constant 1 : index
    %c0_14 = arith.constant 0 : index
    %c0_15 = arith.constant 0 : index
    %38 = vector.load %arg2[%c1, %c0_14, %c0_15] : memref<6x8x16xf32, #tpu.memory_space<vmem>>, vector<1x8x16xf32>
    %39 = vector.shape_cast %38 : vector<1x8x16xf32> to vector<8x16xf32>
    %40 = vector.shape_cast %37 : vector<8x16xf32> to vector<1x8x16xf32>
    tpu.vector_store %arg2[%c1, %c0_14, %c0_15], %40 {strides = array<i32>} : memref<6x8x16xf32, #tpu.memory_space<vmem>>, vector<1x8x16xf32>,
    %41 = arith.addf %37, %27 : vector<8x16xf32>
    %c2 = arith.constant 2 : index
    %c0_16 = arith.constant 0 : index
    %c0_17 = arith.constant 0 : index
    %42 = vector.load %arg2[%c2, %c0_16, %c0_17] : memref<6x8x16xf32, #tpu.memory_space<vmem>>, vector<1x8x16xf32>
    %43 = vector.shape_cast %42 : vector<1x8x16xf32> to vector<8x16xf32>
    %44 = vector.shape_cast %41 : vector<8x16xf32> to vector<1x8x16xf32>
    tpu.vector_store %arg2[%c2, %c0_16, %c0_17], %44 {strides = array<i32>} : memref<6x8x16xf32, #tpu.memory_space<vmem>>, vector<1x8x16xf32>,
    %c15_i32_18 = arith.constant 15 : i32
    %45 = tpu.dynamic_rotate %20 by %c15_i32_18 dim 1 : vector<8x16xf32>, i32 -> vector<8x16xf32>
    %cst_19 = arith.constant 0.000000e+00 : f32
    %46 = vector.broadcast %cst_19 : f32 to vector<8x16xf32>
    %47 = arith.select %5, %46, %45 : vector<8x16xi1>, vector<8x16xf32>
    %48 = arith.subf %47, %20 : vector<8x16xf32>
    %cst_20 = arith.constant 0.142857149 : f32
    %49 = vector.broadcast %cst_20 : f32 to vector<8x16xf32>
    %50 = arith.mulf %48, %49 : vector<8x16xf32>
    %51 = arith.addf %20, %21 : vector<8x16xf32>
    %cst_21 = arith.constant 3.000000e+00 : f32
    %52 = vector.broadcast %cst_21 : f32 to vector<8x16xf32>
    %53 = arith.mulf %52, %51 : vector<8x16xf32>
    %54 = arith.addf %53, %47 : vector<8x16xf32>
    %cst_22 = arith.constant 0.142857149 : f32
    %55 = vector.broadcast %cst_22 : f32 to vector<8x16xf32>
    %56 = arith.mulf %54, %55 : vector<8x16xf32>
    %c3 = arith.constant 3 : index
    %c0_23 = arith.constant 0 : index
    %c0_24 = arith.constant 0 : index
    %57 = vector.load %arg2[%c3, %c0_23, %c0_24] : memref<6x8x16xf32, #tpu.memory_space<vmem>>, vector<1x8x16xf32>
    %58 = vector.shape_cast %57 : vector<1x8x16xf32> to vector<8x16xf32>
    %59 = vector.shape_cast %56 : vector<8x16xf32> to vector<1x8x16xf32>
    tpu.vector_store %arg2[%c3, %c0_23, %c0_24], %59 {strides = array<i32>} : memref<6x8x16xf32, #tpu.memory_space<vmem>>, vector<1x8x16xf32>,
    %60 = arith.addf %56, %50 : vector<8x16xf32>
    %c4 = arith.constant 4 : index
    %c0_25 = arith.constant 0 : index
    %c0_26 = arith.constant 0 : index
    %61 = vector.load %arg2[%c4, %c0_25, %c0_26] : memref<6x8x16xf32, #tpu.memory_space<vmem>>, vector<1x8x16xf32>
    %62 = vector.shape_cast %61 : vector<1x8x16xf32> to vector<8x16xf32>
    %63 = vector.shape_cast %60 : vector<8x16xf32> to vector<1x8x16xf32>
    tpu.vector_store %arg2[%c4, %c0_25, %c0_26], %63 {strides = array<i32>} : memref<6x8x16xf32, #tpu.memory_space<vmem>>, vector<1x8x16xf32>,
    %64 = arith.addf %60, %50 : vector<8x16xf32>
    %c5 = arith.constant 5 : index
    %c0_27 = arith.constant 0 : index
    %c0_28 = arith.constant 0 : index
    %65 = vector.load %arg2[%c5, %c0_27, %c0_28] : memref<6x8x16xf32, #tpu.memory_space<vmem>>, vector<1x8x16xf32>
    %66 = vector.shape_cast %65 : vector<1x8x16xf32> to vector<8x16xf32>
    %67 = vector.shape_cast %64 : vector<8x16xf32> to vector<1x8x16xf32>
    tpu.vector_store %arg2[%c5, %c0_27, %c0_28], %67 {strides = array<i32>} : memref<6x8x16xf32, #tpu.memory_space<vmem>>, vector<1x8x16xf32>,
    return
  }
  func.func @transform_0(%arg0: i32) -> (i32, i32) {
    %c0_i32 = arith.constant 0 : i32
    %c0_i32_0 = arith.constant 0 : i32
    return %arg0, %c0_i32 : i32, i32
  }
  func.func @transform_1(%arg0: i32) -> (i32, i32, i32) {
    %c0_i32 = arith.constant 0 : i32
    %c0_i32_0 = arith.constant 0 : i32
    %c0_i32_1 = arith.constant 0 : i32
    return %c0_i32, %arg0, %c0_i32_0 : i32, i32, i32
  }
}

</mosaic_0001>

<llo_original>
// kernel: tpu_custom_call.1
$region0: #{tpu_custom_call.1}
  #allocation0 [shape = 'u32[]', space=smem, size = 0x4, offset = 0x4, fixed_abs, tag = 'smem constant byte address 0x4 - core index']
  #allocation1 [shape = 'u32[72,128]{1,0:T(1,128)}', space=vmem, size = 0x9000, scoped, tag = 'internal scratch']
  %s0 = inlined_call_operand.hbm [shape: f32[8,16], index: 0, kind: input, shape index: {}]
  %s1 = inlined_call_operand.hbm [shape: f32[8,96], index: 1, kind: output, shape index: {}]
  %s2 = sld [smem:[#allocation0]]
  $region18: #{tpu_custom_call.1} parent=0
    _
  %s4 = ssub.s32 1, %s2
  %s5 = scalar_select 0, %s4, %s2
  $region1: #{tpu_custom_call.1} parent=0
    #allocation2 [shape = 'u8[4096]{0}', space=vmem, size = 0x1000, scoped, tag = 'input window, operand 0, single buffered']
    #allocation3 [shape = 's32[1]{0}', space=sflag, size = 0x4, scoped, tag = 'scoped memory for tpu_custom_call.1']
    #allocation4 [shape = 's32[1]{0}', space=sflag, size = 0x4, scoped, tag = 'scoped memory for tpu_custom_call.1']
    #allocation5 [shape = 'u8[4096]{0}', space=vmem, size = 0x1000, scoped, tag = 'output window, operand 0, single buffered']
    %6 = vsyncpa [#allocation3], 0
    %7 = vsyncpa [#allocation4], 0
    // Predicated region
    $region2: #{tpu_custom_call.1} parent=1 // pred_check
      _
    $region3: #{tpu_custom_call.1} parent=1 // pred_check_branch
      %9 = sbr.rel (0) target = $region5
    $region4: #{tpu_custom_call.1} parent=1 // pred_region
      %11 = vsyncadd [#allocation3], 0
      %s13 = sshll.u32 %s0, 4
      %s14 = int_to_ptr.hbm [resolvable:$true] %s13
      %s15 = sshll.u32 [#allocation2], 4
      %s16 = int_to_ptr.vmem [resolvable:$true] %s15
      %18 = dma.hbm_to_vmem [thread:$0]  %s14, 128, %s16, [#allocation3]
    $region5: #{tpu_custom_call.1} parent=1 // pred_fallthru
      _
    // Predicated region
    $region6: #{tpu_custom_call.1} parent=1 // pred_check
      _
    $region7: #{tpu_custom_call.1} parent=1 // pred_check_branch
      %20 = sbr.rel (0) target = $region9
    $region8: #{tpu_custom_call.1} parent=1 // pred_region
      %22 = dma.done [#allocation3], 128
    $region9: #{tpu_custom_call.1} parent=1 // pred_fallthru
      _
    %v23 = vld [vmem:[#allocation2] sm:$0xff]
    %v24 = vlaneseq
    %v25 = vand.u32 %v24, 127
    %vm26 = vcmp.eq.s32.totalorder %v25, 0
    %vm27 = vcmp.eq.s32.totalorder %v25, 15
    %vm28 = vcmask 1047680
    %29 = vrot.lane.b32.xlu0 %v23, 16
    %v30 = vpop.permute.xlu0 %29
    %v31 = vsel %vm28, %v30, %v23
    %32 = vrot.lane.b32.xlu0 %v31, 16
    %v33 = vpop.permute.xlu0 %32
    %v34 = vsel %vm28, %v33, %v23
    %36 = vrot.lane.b32.xlu0 %v34, 113
    %v37 = vpop.permute.xlu0 %36
    %v39 = vsel %vm26, 0.0, %v37
    %40 = vrot.lane.b32.xlu0 %v34, 127
    %v41 = vpop.permute.xlu0 %40
    %v43 = vsel %vm27, 0.0, %v41
    %v44 = vsub.f32 %v43, %v39
    %v45 = vmul.f32 %v44, 0.2
    %v46 = vadd.f32 %v39, %v23
    %v47 = vmul.f32 %v46, 2.0
    %v48 = vadd.f32 %v47, %v43
    %v49 = vmul.f32 %v48, 0.2
    %v50 = vadd.f32 %v49, %v45
    %51 = vrot.lane.b32.xlu0 %v50, 16
    %v52 = vpop.permute.xlu0 %51
    %v53 = vsel %vm28, %v52, %v50
    %54 = vrot.lane.b32.xlu0 %v53, 16
    %v55 = vpop.permute.xlu0 %54
    %v56 = vsel %vm28, %v55, %v50
    %58 = vrot.lane.b32.xlu0 %v56, 113
    %v59 = vpop.permute.xlu0 %58
    %v61 = vsel %vm26, 0.0, %v59
    %v62 = vsub.f32 %v50, %v61
    %v63 = vmul.f32 %v62, 0.14285715
    %v64 = vadd.f32 %v61, %v49
    %v65 = vmul.f32 %v64, 3.0
    %v66 = vadd.f32 %v65, %v50
    %v67 = vmul.f32 %v66, 0.14285715
    %v68 = vadd.f32 %v67, %v63
    %v69 = vadd.f32 %v68, %v63
    %70 = vrot.lane.b32.xlu0 %v49, 16
    %v71 = vpop.permute.xlu0 %70
    %v72 = vsel %vm28, %v71, %v49
    %73 = vrot.lane.b32.xlu0 %v72, 16
    %v74 = vpop.permute.xlu0 %73
    %v75 = vsel %vm28, %v74, %v49
    %77 = vrot.lane.b32.xlu0 %v75, 127
    %v78 = vpop.permute.xlu0 %77
    %v80 = vsel %vm27, 0.0, %v78
    %v81 = vsub.f32 %v80, %v49
    %v82 = vmul.f32 %v81, 0.14285715
    %v83 = vadd.f32 %v49, %v50
    %v84 = vmul.f32 %v83, 3.0
    %v85 = vadd.f32 %v84, %v80
    %v86 = vmul.f32 %v85, 0.14285715
    %v87 = vadd.f32 %v86, %v82
    %v88 = vadd.f32 %v87, %v82
    %v89 = vperm.slane %v67, 0
    %v90 = vlaneseq
    %v91 = vshrl.u32 %v90, 7
    %93 = vset.pattern.permute.xlu0 %v91
    %94 = vperm.xlu0 %93, %v89
    %v95 = vpop.permute.xlu0 %94
    %v96 = vlaneseq
    %v97 = vshrl.u32 %v96, 7
    %v98 = vadd.s32 %v97, 8
    %99 = vset.pattern.permute.xlu0 %v98
    %100 = vperm.xlu0 %99, %v89
    %v101 = vpop.permute.xlu0 %100
    %v102 = vperm.slane %v67, 1
    %v103 = vlaneseq
    %v104 = vshrl.u32 %v103, 7
    %106 = vset.pattern.permute.xlu0 %v104
    %107 = vperm.xlu0 %106, %v102
    %v108 = vpop.permute.xlu0 %107
    %v109 = vlaneseq
    %v110 = vshrl.u32 %v109, 7
    %v111 = vadd.s32 %v110, 8
    %112 = vset.pattern.permute.xlu0 %v111
    %113 = vperm.xlu0 %112, %v102
    %v114 = vpop.permute.xlu0 %113
    %v115 = vperm.slane %v67, 2
    %v116 = vlaneseq
    %v117 = vshrl.u32 %v116, 7
    %119 = vset.pattern.permute.xlu0 %v117
    %120 = vperm.xlu0 %119, %v115
    %v121 = vpop.permute.xlu0 %120
    %v122 = vlaneseq
    %v123 = vshrl.u32 %v122, 7
    %v124 = vadd.s32 %v123, 8
    %125 = vset.pattern.permute.xlu0 %v124
    %126 = vperm.xlu0 %125, %v115
    %v127 = vpop.permute.xlu0 %126
    %v128 = vperm.slane %v67, 3
    %v129 = vlaneseq
    %v130 = vshrl.u32 %v129, 7
    %132 = vset.pattern.permute.xlu0 %v130
    %133 = vperm.xlu0 %132, %v128
    %v134 = vpop.permute.xlu0 %133
    %v135 = vlaneseq
    %v136 = vshrl.u32 %v135, 7
    %v137 = vadd.s32 %v136, 8
    %138 = vset.pattern.permute.xlu0 %v137
    %139 = vperm.xlu0 %138, %v128
    %v140 = vpop.permute.xlu0 %139
    %v141 = vperm.slane %v67, 4
    %v142 = vlaneseq
    %v143 = vshrl.u32 %v142, 7
    %145 = vset.pattern.permute.xlu0 %v143
    %146 = vperm.xlu0 %145, %v141
    %v147 = vpop.permute.xlu0 %146
    %v148 = vlaneseq
    %v149 = vshrl.u32 %v148, 7
    %v150 = vadd.s32 %v149, 8
    %151 = vset.pattern.permute.xlu0 %v150
    %152 = vperm.xlu0 %151, %v141
    %v153 = vpop.permute.xlu0 %152
    %v154 = vperm.slane %v67, 5
    %v155 = vlaneseq
    %v156 = vshrl.u32 %v155, 7
    %158 = vset.pattern.permute.xlu0 %v156
    %159 = vperm.xlu0 %158, %v154
    %v160 = vpop.permute.xlu0 %159
    %v161 = vlaneseq
    %v162 = vshrl.u32 %v161, 7
    %v163 = vadd.s32 %v162, 8
    %164 = vset.pattern.permute.xlu0 %v163
    %165 = vperm.xlu0 %164, %v154
    %v166 = vpop.permute.xlu0 %165
    %v167 = vperm.slane %v67, 6
    %v168 = vlaneseq
    %v169 = vshrl.u32 %v168, 7
    %171 = vset.pattern.permute.xlu0 %v169
    %172 = vperm.xlu0 %171, %v167
    %v173 = vpop.permute.xlu0 %172
    %v174 = vlaneseq
    %v175 = vshrl.u32 %v174, 7
    %v176 = vadd.s32 %v175, 8
    %177 = vset.pattern.permute.xlu0 %v176
    %178 = vperm.xlu0 %177, %v167
    %v179 = vpop.permute.xlu0 %178
    %v180 = vperm.slane %v67, 7
    %v181 = vlaneseq
    %v182 = vshrl.u32 %v181, 7
    %184 = vset.pattern.permute.xlu0 %v182
    %185 = vperm.xlu0 %184, %v180
    %v186 = vpop.permute.xlu0 %185
    %v187 = vlaneseq
    %v188 = vshrl.u32 %v187, 7
    %v189 = vadd.s32 %v188, 8
    %190 = vset.pattern.permute.xlu0 %v189
    %191 = vperm.xlu0 %190, %v180
    %v192 = vpop.permute.xlu0 %191
    %v193 = vperm.slane %v68, 0
    %v194 = vlaneseq
    %v195 = vshrl.u32 %v194, 7
    %197 = vset.pattern.permute.xlu0 %v195
    %198 = vperm.xlu0 %197, %v193
    %v199 = vpop.permute.xlu0 %198
    %v200 = vlaneseq
    %v201 = vshrl.u32 %v200, 7
    %v202 = vadd.s32 %v201, 8
    %203 = vset.pattern.permute.xlu0 %v202
    %204 = vperm.xlu0 %203, %v193
    %v205 = vpop.permute.xlu0 %204
    %v206 = vperm.slane %v68, 1
    %v207 = vlaneseq
    %v208 = vshrl.u32 %v207, 7
    %210 = vset.pattern.permute.xlu0 %v208
    %211 = vperm.xlu0 %210, %v206
    %v212 = vpop.permute.xlu0 %211
    %v213 = vlaneseq
    %v214 = vshrl.u32 %v213, 7
    %v215 = vadd.s32 %v214, 8
    %216 = vset.pattern.permute.xlu0 %v215
    %217 = vperm.xlu0 %216, %v206
    %v218 = vpop.permute.xlu0 %217
    %v219 = vperm.slane %v68, 2
    %v220 = vlaneseq
    %v221 = vshrl.u32 %v220, 7
    %223 = vset.pattern.permute.xlu0 %v221
    %224 = vperm.xlu0 %223, %v219
    %v225 = vpop.permute.xlu0 %224
    %v226 = vlaneseq
    %v227 = vshrl.u32 %v226, 7
    %v228 = vadd.s32 %v227, 8
    %229 = vset.pattern.permute.xlu0 %v228
    %230 = vperm.xlu0 %229, %v219
    %v231 = vpop.permute.xlu0 %230
    %v232 = vperm.slane %v68, 3
    %v233 = vlaneseq
    %v234 = vshrl.u32 %v233, 7
    %236 = vset.pattern.permute.xlu0 %v234
    %237 = vperm.xlu0 %236, %v232
    %v238 = vpop.permute.xlu0 %237
    %v239 = vlaneseq
    %v240 = vshrl.u32 %v239, 7
    %v241 = vadd.s32 %v240, 8
    %242 = vset.pattern.permute.xlu0 %v241
    %243 = vperm.xlu0 %242, %v232
    %v244 = vpop.permute.xlu0 %243
    %v245 = vperm.slane %v68, 4
    %v246 = vlaneseq
    %v247 = vshrl.u32 %v246, 7
    %249 = vset.pattern.permute.xlu0 %v247
    %250 = vperm.xlu0 %249, %v245
    %v251 = vpop.permute.xlu0 %250
    %v252 = vlaneseq
    %v253 = vshrl.u32 %v252, 7
    %v254 = vadd.s32 %v253, 8
    %255 = vset.pattern.permute.xlu0 %v254
    %256 = vperm.xlu0 %255, %v245
    %v257 = vpop.permute.xlu0 %256
    %v258 = vperm.slane %v68, 5
    %v259 = vlaneseq
    %v260 = vshrl.u32 %v259, 7
    %262 = vset.pattern.permute.xlu0 %v260
    %263 = vperm.xlu0 %262, %v258
    %v264 = vpop.permute.xlu0 %263
    %v265 = vlaneseq
    %v266 = vshrl.u32 %v265, 7
    %v267 = vadd.s32 %v266, 8
    %268 = vset.pattern.permute.xlu0 %v267
    %269 = vperm.xlu0 %268, %v258
    %v270 = vpop.permute.xlu0 %269
    %v271 = vperm.slane %v68, 6
    %v272 = vlaneseq
    %v273 = vshrl.u32 %v272, 7
    %275 = vset.pattern.permute.xlu0 %v273
    %276 = vperm.xlu0 %275, %v271
    %v277 = vpop.permute.xlu0 %276
    %v278 = vlaneseq
    %v279 = vshrl.u32 %v278, 7
    %v280 = vadd.s32 %v279, 8
    %281 = vset.pattern.permute.xlu0 %v280
    %282 = vperm.xlu0 %281, %v271
    %v283 = vpop.permute.xlu0 %282
    %v284 = vperm.slane %v68, 7
    %v285 = vlaneseq
    %v286 = vshrl.u32 %v285, 7
    %288 = vset.pattern.permute.xlu0 %v286
    %289 = vperm.xlu0 %288, %v284
    %v290 = vpop.permute.xlu0 %289
    %v291 = vlaneseq
    %v292 = vshrl.u32 %v291, 7
    %v293 = vadd.s32 %v292, 8
    %294 = vset.pattern.permute.xlu0 %v293
    %295 = vperm.xlu0 %294, %v284
    %v296 = vpop.permute.xlu0 %295
    %v297 = vperm.slane %v69, 0
    %v298 = vlaneseq
    %v299 = vshrl.u32 %v298, 7
    %301 = vset.pattern.permute.xlu0 %v299
    %302 = vperm.xlu0 %301, %v297
    %v303 = vpop.permute.xlu0 %302
    %v304 = vlaneseq
    %v305 = vshrl.u32 %v304, 7
    %v306 = vadd.s32 %v305, 8
    %307 = vset.pattern.permute.xlu0 %v306
    %308 = vperm.xlu0 %307, %v297
    %v309 = vpop.permute.xlu0 %308
    %v310 = vperm.slane %v69, 1
    %v311 = vlaneseq
    %v312 = vshrl.u32 %v311, 7
    %314 = vset.pattern.permute.xlu0 %v312
    %315 = vperm.xlu0 %314, %v310
    %v316 = vpop.permute.xlu0 %315
    %v317 = vlaneseq
    %v318 = vshrl.u32 %v317, 7
    %v319 = vadd.s32 %v318, 8
    %320 = vset.pattern.permute.xlu0 %v319
    %321 = vperm.xlu0 %320, %v310
    %v322 = vpop.permute.xlu0 %321
    %v323 = vperm.slane %v69, 2
    %v324 = vlaneseq
    %v325 = vshrl.u32 %v324, 7
    %327 = vset.pattern.permute.xlu0 %v325
    %328 = vperm.xlu0 %327, %v323
    %v329 = vpop.permute.xlu0 %328
    %v330 = vlaneseq
    %v331 = vshrl.u32 %v330, 7
    %v332 = vadd.s32 %v331, 8
    %333 = vset.pattern.permute.xlu0 %v332
    %334 = vperm.xlu0 %333, %v323
    %v335 = vpop.permute.xlu0 %334
    %v336 = vperm.slane %v69, 3
    %v337 = vlaneseq
    %v338 = vshrl.u32 %v337, 7
    %340 = vset.pattern.permute.xlu0 %v338
    %341 = vperm.xlu0 %340, %v336
    %v342 = vpop.permute.xlu0 %341
    %v343 = vlaneseq
    %v344 = vshrl.u32 %v343, 7
    %v345 = vadd.s32 %v344, 8
    %346 = vset.pattern.permute.xlu0 %v345
    %347 = vperm.xlu0 %346, %v336
    %v348 = vpop.permute.xlu0 %347
    %v349 = vperm.slane %v69, 4
    %v350 = vlaneseq
    %v351 = vshrl.u32 %v350, 7
    %353 = vset.pattern.permute.xlu0 %v351
    %354 = vperm.xlu0 %353, %v349
    %v355 = vpop.permute.xlu0 %354
    %v356 = vlaneseq
    %v357 = vshrl.u32 %v356, 7
    %v358 = vadd.s32 %v357, 8
    %359 = vset.pattern.permute.xlu0 %v358
    %360 = vperm.xlu0 %359, %v349
    %v361 = vpop.permute.xlu0 %360
    %v362 = vperm.slane %v69, 5
    %v363 = vlaneseq
    %v364 = vshrl.u32 %v363, 7
    %366 = vset.pattern.permute.xlu0 %v364
    %367 = vperm.xlu0 %366, %v362
    %v368 = vpop.permute.xlu0 %367
    %v369 = vlaneseq
    %v370 = vshrl.u32 %v369, 7
    %v371 = vadd.s32 %v370, 8
    %372 = vset.pattern.permute.xlu0 %v371
    %373 = vperm.xlu0 %372, %v362
    %v374 = vpop.permute.xlu0 %373
    %v375 = vperm.slane %v69, 6
    %v376 = vlaneseq
    %v377 = vshrl.u32 %v376, 7
    %379 = vset.pattern.permute.xlu0 %v377
    %380 = vperm.xlu0 %379, %v375
    %v381 = vpop.permute.xlu0 %380
    %v382 = vlaneseq
    %v383 = vshrl.u32 %v382, 7
    %v384 = vadd.s32 %v383, 8
    %385 = vset.pattern.permute.xlu0 %v384
    %386 = vperm.xlu0 %385, %v375
    %v387 = vpop.permute.xlu0 %386
    %v388 = vperm.slane %v69, 7
    %v389 = vlaneseq
    %v390 = vshrl.u32 %v389, 7
    %392 = vset.pattern.permute.xlu0 %v390
    %393 = vperm.xlu0 %392, %v388
    %v394 = vpop.permute.xlu0 %393
    %v395 = vlaneseq
    %v396 = vshrl.u32 %v395, 7
    %v397 = vadd.s32 %v396, 8
    %398 = vset.pattern.permute.xlu0 %v397
    %399 = vperm.xlu0 %398, %v388
    %v400 = vpop.permute.xlu0 %399
    %v401 = vperm.slane %v86, 0
    %v402 = vlaneseq
    %v403 = vshrl.u32 %v402, 7
    %405 = vset.pattern.permute.xlu0 %v403
    %406 = vperm.xlu0 %405, %v401
    %v407 = vpop.permute.xlu0 %406
    %v408 = vlaneseq
    %v409 = vshrl.u32 %v408, 7
    %v410 = vadd.s32 %v409, 8
    %411 = vset.pattern.permute.xlu0 %v410
    %412 = vperm.xlu0 %411, %v401
    %v413 = vpop.permute.xlu0 %412
    %v414 = vperm.slane %v86, 1
    %v415 = vlaneseq
    %v416 = vshrl.u32 %v415, 7
    %418 = vset.pattern.permute.xlu0 %v416
    %419 = vperm.xlu0 %418, %v414
    %v420 = vpop.permute.xlu0 %419
    %v421 = vlaneseq
    %v422 = vshrl.u32 %v421, 7
    %v423 = vadd.s32 %v422, 8
    %424 = vset.pattern.permute.xlu0 %v423
    %425 = vperm.xlu0 %424, %v414
    %v426 = vpop.permute.xlu0 %425
    %v427 = vperm.slane %v86, 2
    %v428 = vlaneseq
    %v429 = vshrl.u32 %v428, 7
    %431 = vset.pattern.permute.xlu0 %v429
    %432 = vperm.xlu0 %431, %v427
    %v433 = vpop.permute.xlu0 %432
    %v434 = vlaneseq
    %v435 = vshrl.u32 %v434, 7
    %v436 = vadd.s32 %v435, 8
    %437 = vset.pattern.permute.xlu0 %v436
    %438 = vperm.xlu0 %437, %v427
    %v439 = vpop.permute.xlu0 %438
    %v440 = vperm.slane %v86, 3
    %v441 = vlaneseq
    %v442 = vshrl.u32 %v441, 7
    %444 = vset.pattern.permute.xlu0 %v442
    %445 = vperm.xlu0 %444, %v440
    %v446 = vpop.permute.xlu0 %445
    %v447 = vlaneseq
    %v448 = vshrl.u32 %v447, 7
    %v449 = vadd.s32 %v448, 8
    %450 = vset.pattern.permute.xlu0 %v449
    %451 = vperm.xlu0 %450, %v440
    %v452 = vpop.permute.xlu0 %451
    %v453 = vperm.slane %v86, 4
    %v454 = vlaneseq
    %v455 = vshrl.u32 %v454, 7
    %457 = vset.pattern.permute.xlu0 %v455
    %458 = vperm.xlu0 %457, %v453
    %v459 = vpop.permute.xlu0 %458
    %v460 = vlaneseq
    %v461 = vshrl.u32 %v460, 7
    %v462 = vadd.s32 %v461, 8
    %463 = vset.pattern.permute.xlu0 %v462
    %464 = vperm.xlu0 %463, %v453
    %v465 = vpop.permute.xlu0 %464
    %v466 = vperm.slane %v86, 5
    %v467 = vlaneseq
    %v468 = vshrl.u32 %v467, 7
    %470 = vset.pattern.permute.xlu0 %v468
    %471 = vperm.xlu0 %470, %v466
    %v472 = vpop.permute.xlu0 %471
    %v473 = vlaneseq
    %v474 = vshrl.u32 %v473, 7
    %v475 = vadd.s32 %v474, 8
    %476 = vset.pattern.permute.xlu0 %v475
    %477 = vperm.xlu0 %476, %v466
    %v478 = vpop.permute.xlu0 %477
    %v479 = vperm.slane %v86, 6
    %v480 = vlaneseq
    %v481 = vshrl.u32 %v480, 7
    %483 = vset.pattern.permute.xlu0 %v481
    %484 = vperm.xlu0 %483, %v479
    %v485 = vpop.permute.xlu0 %484
    %v486 = vlaneseq
    %v487 = vshrl.u32 %v486, 7
    %v488 = vadd.s32 %v487, 8
    %489 = vset.pattern.permute.xlu0 %v488
    %490 = vperm.xlu0 %489, %v479
    %v491 = vpop.permute.xlu0 %490
    %v492 = vperm.slane %v86, 7
    %v493 = vlaneseq
    %v494 = vshrl.u32 %v493, 7
    %496 = vset.pattern.permute.xlu0 %v494
    %497 = vperm.xlu0 %496, %v492
    %v498 = vpop.permute.xlu0 %497
    %v499 = vlaneseq
    %v500 = vshrl.u32 %v499, 7
    %v501 = vadd.s32 %v500, 8
    %502 = vset.pattern.permute.xlu0 %v501
    %503 = vperm.xlu0 %502, %v492
    %v504 = vpop.permute.xlu0 %503
    %v505 = vperm.slane %v87, 0
    %v506 = vlaneseq
    %v507 = vshrl.u32 %v506, 7
    %509 = vset.pattern.permute.xlu0 %v507
    %510 = vperm.xlu0 %509, %v505
    %v511 = vpop.permute.xlu0 %510
    %v512 = vlaneseq
    %v513 = vshrl.u32 %v512, 7
    %v514 = vadd.s32 %v513, 8
    %515 = vset.pattern.permute.xlu0 %v514
    %516 = vperm.xlu0 %515, %v505
    %v517 = vpop.permute.xlu0 %516
    %v518 = vperm.slane %v87, 1
    %v519 = vlaneseq
    %v520 = vshrl.u32 %v519, 7
    %522 = vset.pattern.permute.xlu0 %v520
    %523 = vperm.xlu0 %522, %v518
    %v524 = vpop.permute.xlu0 %523
    %v525 = vlaneseq
    %v526 = vshrl.u32 %v525, 7
    %v527 = vadd.s32 %v526, 8
    %528 = vset.pattern.permute.xlu0 %v527
    %529 = vperm.xlu0 %528, %v518
    %v530 = vpop.permute.xlu0 %529
    %v531 = vperm.slane %v87, 2
    %v532 = vlaneseq
    %v533 = vshrl.u32 %v532, 7
    %535 = vset.pattern.permute.xlu0 %v533
    %536 = vperm.xlu0 %535, %v531
    %v537 = vpop.permute.xlu0 %536
    %v538 = vlaneseq
    %v539 = vshrl.u32 %v538, 7
    %v540 = vadd.s32 %v539, 8
    %541 = vset.pattern.permute.xlu0 %v540
    %542 = vperm.xlu0 %541, %v531
    %v543 = vpop.permute.xlu0 %542
    %v544 = vperm.slane %v87, 3
    %v545 = vlaneseq
    %v546 = vshrl.u32 %v545, 7
    %548 = vset.pattern.permute.xlu0 %v546
    %549 = vperm.xlu0 %548, %v544
    %v550 = vpop.permute.xlu0 %549
    %v551 = vlaneseq
    %v552 = vshrl.u32 %v551, 7
    %v553 = vadd.s32 %v552, 8
    %554 = vset.pattern.permute.xlu0 %v553
    %555 = vperm.xlu0 %554, %v544
    %v556 = vpop.permute.xlu0 %555
    %v557 = vperm.slane %v87, 4
    %v558 = vlaneseq
    %v559 = vshrl.u32 %v558, 7
    %561 = vset.pattern.permute.xlu0 %v559
    %562 = vperm.xlu0 %561, %v557
    %v563 = vpop.permute.xlu0 %562
    %v564 = vlaneseq
    %v565 = vshrl.u32 %v564, 7
    %v566 = vadd.s32 %v565, 8
    %567 = vset.pattern.permute.xlu0 %v566
    %568 = vperm.xlu0 %567, %v557
    %v569 = vpop.permute.xlu0 %568
    %v570 = vperm.slane %v87, 5
    %v571 = vlaneseq
    %v572 = vshrl.u32 %v571, 7
    %574 = vset.pattern.permute.xlu0 %v572
    %575 = vperm.xlu0 %574, %v570
    %v576 = vpop.permute.xlu0 %575
    %v577 = vlaneseq
    %v578 = vshrl.u32 %v577, 7
    %v579 = vadd.s32 %v578, 8
    %580 = vset.pattern.permute.xlu0 %v579
    %581 = vperm.xlu0 %580, %v570
    %v582 = vpop.permute.xlu0 %581
    %v583 = vperm.slane %v87, 6
    %v584 = vlaneseq
    %v585 = vshrl.u32 %v584, 7
    %587 = vset.pattern.permute.xlu0 %v585
    %588 = vperm.xlu0 %587, %v583
    %v589 = vpop.permute.xlu0 %588
    %v590 = vlaneseq
    %v591 = vshrl.u32 %v590, 7
    %v592 = vadd.s32 %v591, 8
    %593 = vset.pattern.permute.xlu0 %v592
    %594 = vperm.xlu0 %593, %v583
    %v595 = vpop.permute.xlu0 %594
    %v596 = vperm.slane %v87, 7
    %v597 = vlaneseq
    %v598 = vshrl.u32 %v597, 7
    %600 = vset.pattern.permute.xlu0 %v598
    %601 = vperm.xlu0 %600, %v596
    %v602 = vpop.permute.xlu0 %601
    %v603 = vlaneseq
    %v604 = vshrl.u32 %v603, 7
    %v605 = vadd.s32 %v604, 8
    %606 = vset.pattern.permute.xlu0 %v605
    %607 = vperm.xlu0 %606, %v596
    %v608 = vpop.permute.xlu0 %607
    %v609 = vperm.slane %v88, 0
    %v610 = vlaneseq
    %v611 = vshrl.u32 %v610, 7
    %613 = vset.pattern.permute.xlu0 %v611
    %614 = vperm.xlu0 %613, %v609
    %v615 = vpop.permute.xlu0 %614
    %v616 = vlaneseq
    %v617 = vshrl.u32 %v616, 7
    %v618 = vadd.s32 %v617, 8
    %619 = vset.pattern.permute.xlu0 %v618
    %620 = vperm.xlu0 %619, %v609
    %v621 = vpop.permute.xlu0 %620
    %v622 = vperm.slane %v88, 1
    %v623 = vlaneseq
    %v624 = vshrl.u32 %v623, 7
    %626 = vset.pattern.permute.xlu0 %v624
    %627 = vperm.xlu0 %626, %v622
    %v628 = vpop.permute.xlu0 %627
    %v629 = vlaneseq
    %v630 = vshrl.u32 %v629, 7
    %v631 = vadd.s32 %v630, 8
    %632 = vset.pattern.permute.xlu0 %v631
    %633 = vperm.xlu0 %632, %v622
    %v634 = vpop.permute.xlu0 %633
    %v635 = vperm.slane %v88, 2
    %v636 = vlaneseq
    %v637 = vshrl.u32 %v636, 7
    %639 = vset.pattern.permute.xlu0 %v637
    %640 = vperm.xlu0 %639, %v635
    %v641 = vpop.permute.xlu0 %640
    %v642 = vlaneseq
    %v643 = vshrl.u32 %v642, 7
    %v644 = vadd.s32 %v643, 8
    %645 = vset.pattern.permute.xlu0 %v644
    %646 = vperm.xlu0 %645, %v635
    %v647 = vpop.permute.xlu0 %646
    %v648 = vperm.slane %v88, 3
    %v649 = vlaneseq
    %v650 = vshrl.u32 %v649, 7
    %652 = vset.pattern.permute.xlu0 %v650
    %653 = vperm.xlu0 %652, %v648
    %v654 = vpop.permute.xlu0 %653
    %v655 = vlaneseq
    %v656 = vshrl.u32 %v655, 7
    %v657 = vadd.s32 %v656, 8
    %658 = vset.pattern.permute.xlu0 %v657
    %659 = vperm.xlu0 %658, %v648
    %v660 = vpop.permute.xlu0 %659
    %v661 = vperm.slane %v88, 4
    %v662 = vlaneseq
    %v663 = vshrl.u32 %v662, 7
    %665 = vset.pattern.permute.xlu0 %v663
    %666 = vperm.xlu0 %665, %v661
    %v667 = vpop.permute.xlu0 %666
    %v668 = vlaneseq
    %v669 = vshrl.u32 %v668, 7
    %v670 = vadd.s32 %v669, 8
    %671 = vset.pattern.permute.xlu0 %v670
    %672 = vperm.xlu0 %671, %v661
    %v673 = vpop.permute.xlu0 %672
    %v674 = vperm.slane %v88, 5
    %v675 = vlaneseq
    %v676 = vshrl.u32 %v675, 7
    %678 = vset.pattern.permute.xlu0 %v676
    %679 = vperm.xlu0 %678, %v674
    %v680 = vpop.permute.xlu0 %679
    %v681 = vlaneseq
    %v682 = vshrl.u32 %v681, 7
    %v683 = vadd.s32 %v682, 8
    %684 = vset.pattern.permute.xlu0 %v683
    %685 = vperm.xlu0 %684, %v674
    %v686 = vpop.permute.xlu0 %685
    %v687 = vperm.slane %v88, 6
    %v688 = vlaneseq
    %v689 = vshrl.u32 %v688, 7
    %691 = vset.pattern.permute.xlu0 %v689
    %692 = vperm.xlu0 %691, %v687
    %v693 = vpop.permute.xlu0 %692
    %v694 = vlaneseq
    %v695 = vshrl.u32 %v694, 7
    %v696 = vadd.s32 %v695, 8
    %697 = vset.pattern.permute.xlu0 %v696
    %698 = vperm.xlu0 %697, %v687
    %v699 = vpop.permute.xlu0 %698
    %v700 = vperm.slane %v88, 7
    %v701 = vlaneseq
    %v702 = vshrl.u32 %v701, 7
    %704 = vset.pattern.permute.xlu0 %v702
    %705 = vperm.xlu0 %704, %v700
    %v706 = vpop.permute.xlu0 %705
    %v707 = vlaneseq
    %v708 = vshrl.u32 %v707, 7
    %v709 = vadd.s32 %v708, 8
    %710 = vset.pattern.permute.xlu0 %v709
    %711 = vperm.xlu0 %710, %v700
    %v712 = vpop.permute.xlu0 %711
    %vm713 = vcmask 7168
    %v714 = vsel %vm713, %v95, %v199
    %v715 = vsel %vm713, %v101, %v205
    %v716 = vsel %vm713, %v108, %v212
    %v717 = vsel %vm713, %v114, %v218
    %v718 = vsel %vm713, %v121, %v225
    %v719 = vsel %vm713, %v127, %v231
    %v720 = vsel %vm713, %v134, %v238
    %v721 = vsel %vm713, %v140, %v244
    %v722 = vsel %vm713, %v147, %v251
    %v723 = vsel %vm713, %v153, %v257
    %v724 = vsel %vm713, %v160, %v264
    %v725 = vsel %vm713, %v166, %v270
    %v726 = vsel %vm713, %v173, %v277
    %v727 = vsel %vm713, %v179, %v283
    %v728 = vsel %vm713, %v186, %v290
    %v729 = vsel %vm713, %v192, %v296
    %vm730 = vcmask 15360
    %v731 = vsel %vm730, %v714, %v303
    %v732 = vsel %vm730, %v715, %v309
    %v733 = vsel %vm730, %v716, %v316
    %v734 = vsel %vm730, %v717, %v322
    %v735 = vsel %vm730, %v718, %v329
    %v736 = vsel %vm730, %v719, %v335
    %v737 = vsel %vm730, %v720, %v342
    %v738 = vsel %vm730, %v721, %v348
    %v739 = vsel %vm730, %v722, %v355
    %v740 = vsel %vm730, %v723, %v361
    %v741 = vsel %vm730, %v724, %v368
    %v742 = vsel %vm730, %v725, %v374
    %v743 = vsel %vm730, %v726, %v381
    %v744 = vsel %vm730, %v727, %v387
    %v745 = vsel %vm730, %v728, %v394
    %v746 = vsel %vm730, %v729, %v400
    %vm747 = vcmask 23552
    %v748 = vsel %vm747, %v731, %v407
    %v749 = vsel %vm747, %v732, %v413
    %v750 = vsel %vm747, %v733, %v420
    %v751 = vsel %vm747, %v734, %v426
    %v752 = vsel %vm747, %v735, %v433
    %v753 = vsel %vm747, %v736, %v439
    %v754 = vsel %vm747, %v737, %v446
    %v755 = vsel %vm747, %v738, %v452
    %v756 = vsel %vm747, %v739, %v459
    %v757 = vsel %vm747, %v740, %v465
    %v758 = vsel %vm747, %v741, %v472
    %v759 = vsel %vm747, %v742, %v478
    %v760 = vsel %vm747, %v743, %v485
    %v761 = vsel %vm747, %v744, %v491
    %v762 = vsel %vm747, %v745, %v498
    %v763 = vsel %vm747, %v746, %v504
    %vm764 = vcmask 31744
    %v765 = vsel %vm764, %v748, %v511
    %v766 = vsel %vm764, %v749, %v517
    %v767 = vsel %vm764, %v750, %v524
    %v768 = vsel %vm764, %v751, %v530
    %v769 = vsel %vm764, %v752, %v537
    %v770 = vsel %vm764, %v753, %v543
    %v771 = vsel %vm764, %v754, %v550
    %v772 = vsel %vm764, %v755, %v556
    %v773 = vsel %vm764, %v756, %v563
    %v774 = vsel %vm764, %v757, %v569
    %v775 = vsel %vm764, %v758, %v576
    %v776 = vsel %vm764, %v759, %v582
    %v777 = vsel %vm764, %v760, %v589
    %v778 = vsel %vm764, %v761, %v595
    %v779 = vsel %vm764, %v762, %v602
    %v780 = vsel %vm764, %v763, %v608
    %vm781 = vcmask 39936
    %v782 = vsel %vm781, %v765, %v615
    %v783 = vsel %vm781, %v766, %v621
    %v784 = vsel %vm781, %v767, %v628
    %v785 = vsel %vm781, %v768, %v634
    %v786 = vsel %vm781, %v769, %v641
    %v787 = vsel %vm781, %v770, %v647
    %v788 = vsel %vm781, %v771, %v654
    %v789 = vsel %vm781, %v772, %v660
    %v790 = vsel %vm781, %v773, %v667
    %v791 = vsel %vm781, %v774, %v673
    %v792 = vsel %vm781, %v775, %v680
    %v793 = vsel %vm781, %v776, %v686
    %v794 = vsel %vm781, %v777, %v693
    %v795 = vsel %vm781, %v778, %v699
    %v796 = vsel %vm781, %v779, %v706
    %v797 = vsel %vm781, %v780, %v712
    %v798 = vrot.slane %v786, 4
    %vm799 = vcmask 1047556
    %v800 = vsel %vm799, %v798, %v782
    %v801 = vrot.slane %v782, 4
    %v802 = vsel %vm799, %v786, %v801
    %v804 = vunpack.c.l.s4 1983009808
    %v805 = vunpack.c.0.s8 %v804
    %v806 = vperm.slane %v800, %v805
    %v808 = vunpack.c.l.s4 1983009808
    %v809 = vunpack.c.0.s8 %v808
    %v810 = vperm.slane %v802, %v809
    %v811 = vrot.slane %v788, 4
    %v812 = vsel %vm799, %v811, %v784
    %v813 = vrot.slane %v784, 4
    %v814 = vsel %vm799, %v788, %v813
    %v816 = vunpack.c.l.s4 1983009808
    %v817 = vunpack.c.0.s8 %v816
    %v818 = vperm.slane %v812, %v817
    %v820 = vunpack.c.l.s4 1983009808
    %v821 = vunpack.c.0.s8 %v820
    %v822 = vperm.slane %v814, %v821
    %v823 = vrot.slane %v794, 4
    %v824 = vsel %vm799, %v823, %v790
    %v825 = vrot.slane %v790, 4
    %v826 = vsel %vm799, %v794, %v825
    %v828 = vunpack.c.l.s4 1983009808
    %v829 = vunpack.c.0.s8 %v828
    %v830 = vperm.slane %v824, %v829
    %v832 = vunpack.c.l.s4 1983009808
    %v833 = vunpack.c.0.s8 %v832
    %v834 = vperm.slane %v826, %v833
    %v835 = vrot.slane %v796, 4
    %v836 = vsel %vm799, %v835, %v792
    %v837 = vrot.slane %v792, 4
    %v838 = vsel %vm799, %v796, %v837
    %v840 = vunpack.c.l.s4 1983009808
    %v841 = vunpack.c.0.s8 %v840
    %v842 = vperm.slane %v836, %v841
    %v844 = vunpack.c.l.s4 1983009808
    %v845 = vunpack.c.0.s8 %v844
    %v846 = vperm.slane %v838, %v845
    %v847 = vrot.slane %v818, 4
    %v848 = vsel %vm799, %v847, %v806
    %v849 = vrot.slane %v806, 4
    %v850 = vsel %vm799, %v818, %v849
    %v852 = vunpack.c.l.s4 1934713408
    %v853 = vunpack.c.0.s8 %v852
    %v854 = vperm.slane %v848, %v853
    %v856 = vunpack.c.l.s4 1934713408
    %v857 = vunpack.c.0.s8 %v856
    %v858 = vperm.slane %v850, %v857
    %v859 = vrot.slane %v822, 4
    %v860 = vsel %vm799, %v859, %v810
    %v861 = vrot.slane %v810, 4
    %v862 = vsel %vm799, %v822, %v861
    %v864 = vunpack.c.l.s4 1934713408
    %v865 = vunpack.c.0.s8 %v864
    %v866 = vperm.slane %v860, %v865
    %v868 = vunpack.c.l.s4 1934713408
    %v869 = vunpack.c.0.s8 %v868
    %v870 = vperm.slane %v862, %v869
    %v871 = vrot.slane %v842, 4
    %v872 = vsel %vm799, %v871, %v830
    %v873 = vrot.slane %v830, 4
    %v874 = vsel %vm799, %v842, %v873
    %v876 = vunpack.c.l.s4 1934713408
    %v877 = vunpack.c.0.s8 %v876
    %v878 = vperm.slane %v872, %v877
    %v880 = vunpack.c.l.s4 1934713408
    %v881 = vunpack.c.0.s8 %v880
    %v882 = vperm.slane %v874, %v881
    %v883 = vrot.slane %v846, 4
    %v884 = vsel %vm799, %v883, %v834
    %v885 = vrot.slane %v834, 4
    %v886 = vsel %vm799, %v846, %v885
    %v888 = vunpack.c.l.s4 1934713408
    %v889 = vunpack.c.0.s8 %v888
    %v890 = vperm.slane %v884, %v889
    %v892 = vunpack.c.l.s4 1934713408
    %v893 = vunpack.c.0.s8 %v892
    %v894 = vperm.slane %v886, %v893
    %v895 = vrot.slane %v878, 4
    %v896 = vsel %vm799, %v895, %v854
    %v897 = vrot.slane %v854, 4
    %v898 = vsel %vm799, %v878, %v897
    %v899 = vrot.slane %v882, 4
    %v900 = vsel %vm799, %v899, %v858
    %v901 = vrot.slane %v858, 4
    %v902 = vsel %vm799, %v882, %v901
    %v903 = vrot.slane %v890, 4
    %v904 = vsel %vm799, %v903, %v866
    %v905 = vrot.slane %v866, 4
    %v906 = vsel %vm799, %v890, %v905
    %v907 = vrot.slane %v894, 4
    %v908 = vsel %vm799, %v907, %v870
    %v909 = vrot.slane %v870, 4
    %v910 = vsel %vm799, %v894, %v909
    %v911 = vrot.slane %v787, 4
    %v912 = vsel %vm799, %v911, %v783
    %v913 = vrot.slane %v783, 4
    %v914 = vsel %vm799, %v787, %v913
    %v916 = vunpack.c.l.s4 1983009808
    %v917 = vunpack.c.0.s8 %v916
    %v918 = vperm.slane %v912, %v917
    %v920 = vunpack.c.l.s4 1983009808
    %v921 = vunpack.c.0.s8 %v920
    %v922 = vperm.slane %v914, %v921
    %v923 = vrot.slane %v789, 4
    %v924 = vsel %vm799, %v923, %v785
    %v925 = vrot.slane %v785, 4
    %v926 = vsel %vm799, %v789, %v925
    %v928 = vunpack.c.l.s4 1983009808
    %v929 = vunpack.c.0.s8 %v928
    %v930 = vperm.slane %v924, %v929
    %v932 = vunpack.c.l.s4 1983009808
    %v933 = vunpack.c.0.s8 %v932
    %v934 = vperm.slane %v926, %v933
    %v935 = vrot.slane %v795, 4
    %v936 = vsel %vm799, %v935, %v791
    %v937 = vrot.slane %v791, 4
    %v938 = vsel %vm799, %v795, %v937
    %v940 = vunpack.c.l.s4 1983009808
    %v941 = vunpack.c.0.s8 %v940
    %v942 = vperm.slane %v936, %v941
    %v944 = vunpack.c.l.s4 1983009808
    %v945 = vunpack.c.0.s8 %v944
    %v946 = vperm.slane %v938, %v945
    %v947 = vrot.slane %v797, 4
    %v948 = vsel %vm799, %v947, %v793
    %v949 = vrot.slane %v793, 4
    %v950 = vsel %vm799, %v797, %v949
    %v952 = vunpack.c.l.s4 1983009808
    %v953 = vunpack.c.0.s8 %v952
    %v954 = vperm.slane %v948, %v953
    %v956 = vunpack.c.l.s4 1983009808
    %v957 = vunpack.c.0.s8 %v956
    %v958 = vperm.slane %v950, %v957
    %v959 = vrot.slane %v930, 4
    %v960 = vsel %vm799, %v959, %v918
    %v961 = vrot.slane %v918, 4
    %v962 = vsel %vm799, %v930, %v961
    %v964 = vunpack.c.l.s4 1934713408
    %v965 = vunpack.c.0.s8 %v964
    %v966 = vperm.slane %v960, %v965
    %v968 = vunpack.c.l.s4 1934713408
    %v969 = vunpack.c.0.s8 %v968
    %v970 = vperm.slane %v962, %v969
    %v971 = vrot.slane %v934, 4
    %v972 = vsel %vm799, %v971, %v922
    %v973 = vrot.slane %v922, 4
    %v974 = vsel %vm799, %v934, %v973
    %v976 = vunpack.c.l.s4 1934713408
    %v977 = vunpack.c.0.s8 %v976
    %v978 = vperm.slane %v972, %v977
    %v980 = vunpack.c.l.s4 1934713408
    %v981 = vunpack.c.0.s8 %v980
    %v982 = vperm.slane %v974, %v981
    %v983 = vrot.slane %v954, 4
    %v984 = vsel %vm799, %v983, %v942
    %v985 = vrot.slane %v942, 4
    %v986 = vsel %vm799, %v954, %v985
    %v988 = vunpack.c.l.s4 1934713408
    %v989 = vunpack.c.0.s8 %v988
    %v990 = vperm.slane %v984, %v989
    %v992 = vunpack.c.l.s4 1934713408
    %v993 = vunpack.c.0.s8 %v992
    %v994 = vperm.slane %v986, %v993
    %v995 = vrot.slane %v958, 4
    %v996 = vsel %vm799, %v995, %v946
    %v997 = vrot.slane %v946, 4
    %v998 = vsel %vm799, %v958, %v997
    %v1000 = vunpack.c.l.s4 1934713408
    %v1001 = vunpack.c.0.s8 %v1000
    %v1002 = vperm.slane %v996, %v1001
    %v1004 = vunpack.c.l.s4 1934713408
    %v1005 = vunpack.c.0.s8 %v1004
    %v1006 = vperm.slane %v998, %v1005
    %v1007 = vrot.slane %v990, 4
    %v1008 = vsel %vm799, %v1007, %v966
    %v1009 = vrot.slane %v966, 4
    %v1010 = vsel %vm799, %v990, %v1009
    %v1011 = vrot.slane %v994, 4
    %v1012 = vsel %vm799, %v1011, %v970
    %v1013 = vrot.slane %v970, 4
    %v1014 = vsel %vm799, %v994, %v1013
    %v1015 = vrot.slane %v1002, 4
    %v1016 = vsel %vm799, %v1015, %v978
    %v1017 = vrot.slane %v978, 4
    %v1018 = vsel %vm799, %v1002, %v1017
    %v1019 = vrot.slane %v1006, 4
    %v1020 = vsel %vm799, %v1019, %v982
    %v1021 = vrot.slane %v982, 4
    %v1022 = vsel %vm799, %v1006, %v1021
    %1024 = vrot.lane.b32.xlu0 %v898, 6
    %v1025 = vpop.permute.xlu0 %1024
    %1028 = vrot.lane.b32.xlu0 %v900, 12
    %v1029 = vpop.permute.xlu0 %1028
    %1032 = vrot.lane.b32.xlu0 %v902, 18
    %v1033 = vpop.permute.xlu0 %1032
    %1036 = vrot.lane.b32.xlu0 %v904, 24
    %v1037 = vpop.permute.xlu0 %1036
    %1040 = vrot.lane.b32.xlu0 %v906, 30
    %v1041 = vpop.permute.xlu0 %1040
    %1044 = vrot.lane.b32.xlu0 %v908, 36
    %v1045 = vpop.permute.xlu0 %1044
    %1048 = vrot.lane.b32.xlu0 %v910, 42
    %v1049 = vpop.permute.xlu0 %1048
    %1052 = vrot.lane.b32.xlu0 %v1008, 48
    %v1053 = vpop.permute.xlu0 %1052
    %1056 = vrot.lane.b32.xlu0 %v1010, 54
    %v1057 = vpop.permute.xlu0 %1056
    %1060 = vrot.lane.b32.xlu0 %v1012, 60
    %v1061 = vpop.permute.xlu0 %1060
    %1064 = vrot.lane.b32.xlu0 %v1014, 66
    %v1065 = vpop.permute.xlu0 %1064
    %1068 = vrot.lane.b32.xlu0 %v1016, 72
    %v1069 = vpop.permute.xlu0 %1068
    %1072 = vrot.lane.b32.xlu0 %v1018, 78
    %v1073 = vpop.permute.xlu0 %1072
    %1076 = vrot.lane.b32.xlu0 %v1020, 84
    %v1077 = vpop.permute.xlu0 %1076
    %1080 = vrot.lane.b32.xlu0 %v1022, 90
    %v1081 = vpop.permute.xlu0 %1080
    %vm1083 = vcmask 48128
    %v1084 = vsel %vm1083, %v896, %v1025
    %vm1085 = vcmask 97280
    %v1086 = vsel %vm1085, %v1084, %v1029
    %vm1087 = vcmask 146432
    %v1088 = vsel %vm1087, %v1086, %v1033
    %vm1089 = vcmask 195584
    %v1090 = vsel %vm1089, %v1088, %v1037
    %vm1091 = vcmask 244736
    %v1092 = vsel %vm1091, %v1090, %v1041
    %vm1093 = vcmask 293888
    %v1094 = vsel %vm1093, %v1092, %v1045
    %vm1095 = vcmask 343040
    %v1096 = vsel %vm1095, %v1094, %v1049
    %vm1097 = vcmask 392192
    %v1098 = vsel %vm1097, %v1096, %v1053
    %vm1099 = vcmask 441344
    %v1100 = vsel %vm1099, %v1098, %v1057
    %vm1101 = vcmask 490496
    %v1102 = vsel %vm1101, %v1100, %v1061
    %vm1103 = vcmask 539648
    %v1104 = vsel %vm1103, %v1102, %v1065
    %vm1105 = vcmask 588800
    %v1106 = vsel %vm1105, %v1104, %v1069
    %vm1107 = vcmask 637952
    %v1108 = vsel %vm1107, %v1106, %v1073
    %vm1109 = vcmask 687104
    %v1110 = vsel %vm1109, %v1108, %v1077
    %vm1111 = vcmask 736256
    %v1112 = vsel %vm1111, %v1110, %v1081
    %vm1113 = vcmask 785408
    %1114 = vst.msk [vmem:[#allocation5] sm:$0xff] %vm1113, %v1112
    // Predicated region
    $region10: #{tpu_custom_call.1} parent=1 // pred_check
      _
    $region11: #{tpu_custom_call.1} parent=1 // pred_check_branch
      %1116 = sbr.rel (0) target = $region13
    $region12: #{tpu_custom_call.1} parent=1 // pred_region
      %1118 = vsyncadd [#allocation4], 0
      %s1120 = sshll.u32 [#allocation5], 4
      %s1121 = int_to_ptr.vmem [resolvable:$true] %s1120
      %s1122 = sshll.u32 %s1, 4
      %s1123 = int_to_ptr.hbm [resolvable:$true] %s1122
      %1125 = dma.vmem_to_hbm [thread:$0]  %s1121, 128, %s1123, [#allocation4]
    $region13: #{tpu_custom_call.1} parent=1 // pred_fallthru
      _
    // Predicated region
    $region14: #{tpu_custom_call.1} parent=1 // pred_check
      _
    $region15: #{tpu_custom_call.1} parent=1 // pred_check_branch
      %1127 = sbr.rel (0) target = $region17
    $region16: #{tpu_custom_call.1} parent=1 // pred_region
      %1129 = dma.done [#allocation4], 128
    $region17: #{tpu_custom_call.1} parent=1 // pred_fallthru
      _
    %1130 = vsyncpa [#allocation3], 1
    %1131 = vsyncpa [#allocation4], 1

// kernel: tpu_custom_call.1
$region0: #{tpu_custom_call.1}
  #allocation0 [shape = 'u32[]', space=smem, size = 0x4, offset = 0x4, fixed_abs, tag = 'smem constant byte address 0x4 - core index']
  #allocation1 [shape = 'u32[72,128]{1,0:T(1,128)}', space=vmem, size = 0x9000, scoped, tag = 'internal scratch']
  %s0 = inlined_call_operand.hbm [shape: f32[8,16], index: 0, kind: input, shape index: {}]
  %s1 = inlined_call_operand.hbm [shape: f32[6,8,16], index: 1, kind: output, shape index: {}]
  %s2 = sld [smem:[#allocation0]]
  $region18: #{tpu_custom_call.1} parent=0
    _
  %s4 = ssub.s32 1, %s2
  %s5 = scalar_select 0, %s4, %s2
  $region1: #{tpu_custom_call.1} parent=0
    #allocation2 [shape = 'u8[4096]{0}', space=vmem, size = 0x1000, scoped, tag = 'input window, operand 0, single buffered']
    #allocation3 [shape = 's32[1]{0}', space=sflag, size = 0x4, scoped, tag = 'scoped memory for tpu_custom_call.1']
    #allocation4 [shape = 's32[1]{0}', space=sflag, size = 0x4, scoped, tag = 'scoped memory for tpu_custom_call.1']
    #allocation5 [shape = 'u8[24576]{0}', space=vmem, size = 0x6000, scoped, tag = 'output window, operand 0, single buffered']
    %6 = vsyncpa [#allocation3], 0
    %7 = vsyncpa [#allocation4], 0
    // Predicated region
    $region2: #{tpu_custom_call.1} parent=1 // pred_check
      _
    $region3: #{tpu_custom_call.1} parent=1 // pred_check_branch
      %9 = sbr.rel (0) target = $region5
    $region4: #{tpu_custom_call.1} parent=1 // pred_region
      %11 = vsyncadd [#allocation3], 0
      %s13 = sshll.u32 %s0, 4
      %s14 = int_to_ptr.hbm [resolvable:$true] %s13
      %s15 = sshll.u32 [#allocation2], 4
      %s16 = int_to_ptr.vmem [resolvable:$true] %s15
      %18 = dma.hbm_to_vmem [thread:$0]  %s14, 128, %s16, [#allocation3]
    $region5: #{tpu_custom_call.1} parent=1 // pred_fallthru
      _
    // Predicated region
    $region6: #{tpu_custom_call.1} parent=1 // pred_check
      _
    $region7: #{tpu_custom_call.1} parent=1 // pred_check_branch
      %20 = sbr.rel (0) target = $region9
    $region8: #{tpu_custom_call.1} parent=1 // pred_region
      %22 = dma.done [#allocation3], 128
    $region9: #{tpu_custom_call.1} parent=1 // pred_fallthru
      _
    %v23 = vld [vmem:[#allocation2] sm:$0xff]
    %v24 = vlaneseq
    %v25 = vand.u32 %v24, 127
    %vm26 = vcmp.eq.s32.totalorder %v25, 0
    %vm27 = vcmp.eq.s32.totalorder %v25, 15
    %vm28 = vcmask 1047680
    %29 = vrot.lane.b32.xlu0 %v23, 16
    %v30 = vpop.permute.xlu0 %29
    %v31 = vsel %vm28, %v30, %v23
    %32 = vrot.lane.b32.xlu0 %v31, 16
    %v33 = vpop.permute.xlu0 %32
    %v34 = vsel %vm28, %v33, %v23
    %36 = vrot.lane.b32.xlu0 %v34, 113
    %v37 = vpop.permute.xlu0 %36
    %v39 = vsel %vm26, 0.0, %v37
    %40 = vrot.lane.b32.xlu0 %v34, 127
    %v41 = vpop.permute.xlu0 %40
    %v43 = vsel %vm27, 0.0, %v41
    %v44 = vsub.f32 %v43, %v39
    %v45 = vmul.f32 %v44, 0.2
    %v46 = vadd.f32 %v39, %v23
    %v47 = vmul.f32 %v46, 2.0
    %v48 = vadd.f32 %v47, %v43
    %v49 = vmul.f32 %v48, 0.2
    %v50 = vadd.f32 %v49, %v45
    %51 = vrot.lane.b32.xlu0 %v50, 16
    %v52 = vpop.permute.xlu0 %51
    %v53 = vsel %vm28, %v52, %v50
    %54 = vrot.lane.b32.xlu0 %v53, 16
    %v55 = vpop.permute.xlu0 %54
    %v56 = vsel %vm28, %v55, %v50
    %58 = vrot.lane.b32.xlu0 %v56, 113
    %v59 = vpop.permute.xlu0 %58
    %v61 = vsel %vm26, 0.0, %v59
    %v62 = vsub.f32 %v50, %v61
    %v63 = vmul.f32 %v62, 0.14285715
    %v64 = vadd.f32 %v61, %v49
    %v65 = vmul.f32 %v64, 3.0
    %v66 = vadd.f32 %v65, %v50
    %v67 = vmul.f32 %v66, 0.14285715
    %vm68 = vcmask 130048
    %69 = vst.msk [vmem:[#allocation5] sm:$0xff] %vm68, %v67
    %v70 = vadd.f32 %v67, %v63
    %s71 = scalar_lea.vmem [#allocation5], 8
    %72 = vst.msk [vmem:[%s71] sm:$0xff] %vm68, %v70
    %v73 = vadd.f32 %v70, %v63
    %s74 = scalar_lea.vmem [#allocation5], 16
    %75 = vst.msk [vmem:[%s74] sm:$0xff] %vm68, %v73
    %76 = vrot.lane.b32.xlu0 %v49, 16
    %v77 = vpop.permute.xlu0 %76
    %v78 = vsel %vm28, %v77, %v49
    %79 = vrot.lane.b32.xlu0 %v78, 16
    %v80 = vpop.permute.xlu0 %79
    %v81 = vsel %vm28, %v80, %v49
    %83 = vrot.lane.b32.xlu0 %v81, 127
    %v84 = vpop.permute.xlu0 %83
    %v86 = vsel %vm27, 0.0, %v84
    %v87 = vsub.f32 %v86, %v49
    %v88 = vmul.f32 %v87, 0.14285715
    %v89 = vadd.f32 %v49, %v50
    %v90 = vmul.f32 %v89, 3.0
    %v91 = vadd.f32 %v90, %v86
    %v92 = vmul.f32 %v91, 0.14285715
    %s93 = scalar_lea.vmem [#allocation5], 24
    %94 = vst.msk [vmem:[%s93] sm:$0xff] %vm68, %v92
    %v95 = vadd.f32 %v92, %v88
    %s96 = scalar_lea.vmem [#allocation5], 32
    %97 = vst.msk [vmem:[%s96] sm:$0xff] %vm68, %v95
    %v98 = vadd.f32 %v95, %v88
    %s99 = scalar_lea.vmem [#allocation5], 40
    %100 = vst.msk [vmem:[%s99] sm:$0xff] %vm68, %v98
    // Predicated region
    $region10: #{tpu_custom_call.1} parent=1 // pred_check
      _
    $region11: #{tpu_custom_call.1} parent=1 // pred_check_branch
      %102 = sbr.rel (0) target = $region13
    $region12: #{tpu_custom_call.1} parent=1 // pred_region
      %104 = vsyncadd [#allocation4], 0
      %s105 = sshll.u32 [#allocation5], 4
      %s106 = int_to_ptr.vmem [resolvable:$true] %s105
      %s107 = sshll.u32 %s1, 4
      %s108 = int_to_ptr.hbm [resolvable:$true] %s107
      %113 = dma.vmem_to_hbm [thread:$0]  %s106, 768, %s108, [#allocation4], 128, 128, 8
    $region13: #{tpu_custom_call.1} parent=1 // pred_fallthru
      _
    // Predicated region
    $region14: #{tpu_custom_call.1} parent=1 // pred_check
      _
    $region15: #{tpu_custom_call.1} parent=1 // pred_check_branch
      %115 = sbr.rel (0) target = $region17
    $region16: #{tpu_custom_call.1} parent=1 // pred_region
      %117 = dma.done [#allocation4], 768
    $region17: #{tpu_custom_call.1} parent=1 // pred_fallthru
      _
    %118 = vsyncpa [#allocation3], 1
    %119 = vsyncpa [#allocation4], 1

</llo_original>
